<compile_context>
chip_gen: v5e
topology: v5e:2x2
jax: 0.10.0
libtpu: 0.0.40
codegen_flags: <defaults>
</compile_context>

<pallas_src>
import functools

import numpy as np
import jax
import jax.numpy as jnp
from jax import lax
from jax.experimental import pallas as pl
from jax.experimental.pallas import tpu as pltpu


def _vmem_limit_bytes() -> int:
    """Generation-aware scoped-VMEM limit: ~48 MiB on v7x (64 MiB/core), ~100 MiB on v5e/v6e."""
    cap = 128 * 1024 * 1024
    try:
        cap = int(getattr(pltpu.get_tpu_info(), "vmem_capacity_bytes", cap))
    except Exception:
        pass
    return int(min(cap - 16 * 1024 * 1024, 100 * 1024 * 1024))


def _query_and_group_kernel(xyz_t_ref, hi_ref, lo_ref, new_xyz_ref, new_xyz_t_ref, out_ref,
                            *, radius2, nsample, n_points, s_chunk, tp, cdim, use_roll):
    xyz_t = xyz_t_ref[0]          # (3, N)     exact f32 coords for the ball query
    hi = hi_ref[0]                # (cdim, N)  bf16 gather operand, high half (xyz ++ features)
    lo = lo_ref[0]                # (cdim, N)  bf16 gather operand, low half
    new_xyz = new_xyz_ref[0]      # (tp, 3)    query centers, point-major
    new_xyz_t = new_xyz_t_ref[0]  # (3, tp)    query centers, coord-major (lane-dense)

    # --- squared center->point distances (tp, N); same accumulation order as CUDA ---
    d2 = jnp.zeros((tp, n_points), jnp.float32)
    for c in range(3):
        diff = new_xyz[:, c:c + 1] - xyz_t[c:c + 1, :]     # (tp, 1) - (1, N)
        d2 = d2 + diff * diff
    mask = (d2 < radius2).astype(jnp.float32)              # 1.0 where point is inside the ball

    # --- inclusive prefix count along the point (lane) axis: log-step shift-add scan ---
    incl = mask
    if use_roll:
        lane_idx = lax.broadcasted_iota(jnp.int32, (tp, n_points), 1)
    d = 1
    while d < n_points:
        if use_roll:
            # XLU rotate + VPU select: no full-width VMEM concat copies per scan step.
            shifted = jnp.where(lane_idx >= d, pltpu.roll(incl, shift=d, axis=1), 0.0)
        else:
            shifted = jnp.concatenate(
                [jnp.zeros((tp, d), jnp.float32), incl[:, :n_points - d]], axis=1)
        incl = incl + shifted
        d *= 2
    rank = incl - mask                                      # exclusive count before each point
    count = incl[:, n_points - 1:]                          # (tp, 1) in-ball points per query

    # "ball empty -> take point 0" fallback row; computed once, reused by every slot.
    lane0 = (lax.broadcasted_iota(jnp.int32, (1, n_points), 1) == 0).astype(jnp.float32)
    empty_fb = (count <= 0.0).astype(jnp.float32) * lane0   # (tp, N)

    # --- gather the nsample neighbours: one bf16 hi/lo MXU dot pair per sample chunk ---
    dnums = (((1,), (1,)), ((), ()))                        # contract over the N axis of both
    s0 = 0
    while s0 < nsample:
        sc = min(s_chunk, nsample - s0)
        # target rank per slot: s while the ball still has >s points, else 0
        # (pad with the first in-ball point, matching the CUDA kernel).
        target = jnp.stack(
            [jnp.where(count > float(s0 + t), float(s0 + t), 0.0) for t in range(sc)],
            axis=0)                                          # (sc, tp, 1), cheap column math
        sel = jnp.where(rank[None] == target, mask[None], 0.0)          # (sc, tp, N)
        onehot = (sel + empty_fb[None]).reshape(sc * tp, n_points).astype(jnp.bfloat16)

        g = lax.dot_general(hi, onehot, dnums, preferred_element_type=jnp.float32)
        g = g + lax.dot_general(lo, onehot, dnums, preferred_element_type=jnp.float32)
        # g: (cdim, sc*tp), column index = slot_local * tp + query

        for t in range(sc):
            s = s0 + t
            col = t * tp
            out_ref[0, 0:3, s, :] = g[0:3, col:col + tp] - new_xyz_t    # center-subtract xyz
            if cdim > 3:
                out_ref[0, 3:, s, :] = g[3:, col:col + tp]
        s0 += sc


def query_and_group(xyz, new_xyz, features=None, *, radius, nsample, use_xyz=True):
    """Pallas equivalent of pointnet2 QueryAndGroup.forward."""
    B, N, _ = xyz.shape
    npoint = new_xyz.shape[1]
    assert N < (1 << 24), "exact-f32 rank arithmetic requires N < 2**24"
    if features is None:
        assert use_xyz, "Cannot have no features and not use xyz as a feature!"
        C = 0
    else:
        C = features.shape[1]
    cdim = 3 + C

    xyz_t = jnp.transpose(xyz, (0, 2, 1)).astype(jnp.float32)          # (B, 3, N)
    new_xyz_f = new_xyz.astype(jnp.float32)                            # (B, npoint, 3)
    new_xyz_t = jnp.transpose(new_xyz_f, (0, 2, 1))                    # (B, 3, npoint)

    # merged gather operand: xyz rows ride along with the feature rows in one MXU dot
    if C > 0:
        allfeat = jnp.concatenate([xyz_t, features.astype(jnp.float32)], axis=1)  # (B, cdim, N)
    else:
        allfeat = xyz_t
    # bf16 hi/lo split of the f32 operand: two DEFAULT-precision bf16 dots instead of a
    # 6-pass HIGHEST f32 dot; the one-hot rhs is exact in bf16.
    feat_hi = allfeat.astype(jnp.bfloat16)
    feat_lo = (allfeat - feat_hi.astype(jnp.float32)).astype(jnp.bfloat16)

    tp = npoint if npoint <= 128 else 128        # query tile (lane axis of the kernel output)
    n_ptiles = pl.cdiv(npoint, tp)
    # sample slots per gather dot: target ~256 output lanes (one v6e/v7x MXU N-tile) while
    # keeping the one-hot VMEM footprint small for v7x.
    s_chunk = max(1, min(nsample, 256 // tp))

    kernel = functools.partial(
        _query_and_group_kernel,
        radius2=float(radius) * float(radius),
        nsample=nsample, n_points=N, s_chunk=s_chunk, tp=tp, cdim=cdim,
        use_roll=(N >= 128 and N % 128 == 0))

    out = pl.pallas_call(
        kernel,
        # lane-dense kernel output: npoint in lanes, transposed back below
        out_shape=jax.ShapeDtypeStruct((B, cdim, nsample, npoint), jnp.float32),
        grid=(B, n_ptiles),
        in_specs=[
            pl.BlockSpec((1, 3, N), lambda b, p: (b, 0, 0)),
            pl.BlockSpec((1, cdim, N), lambda b, p: (b, 0, 0)),
            pl.BlockSpec((1, cdim, N), lambda b, p: (b, 0, 0)),
            pl.BlockSpec((1, tp, 3), lambda b, p: (b, p, 0)),
            pl.BlockSpec((1, 3, tp), lambda b, p: (b, 0, p)),
        ],
        out_specs=pl.BlockSpec((1, cdim, nsample, tp), lambda b, p: (b, 0, 0, p)),
        compiler_params=pltpu.CompilerParams(
            dimension_semantics=("parallel", "parallel"),
            vmem_limit_bytes=_vmem_limit_bytes()),
    )(xyz_t, feat_hi, feat_lo, new_xyz_f, new_xyz_t)

    out = jnp.transpose(out, (0, 1, 3, 2))       # (B, 3 + C, npoint, nsample)

    if features is None:
        return out
    if not use_xyz:
        return out[:, 3:]
    return out


def _reference(radius, nsample, xyz, new_xyz, features):
    """Pure NumPy reproduction of BallQuery + GroupingOperation + QueryAndGroup (use_xyz=True)."""
    xyz = np.asarray(xyz, np.float32)
    new_xyz = np.asarray(new_xyz, np.float32)
    features = np.asarray(features, np.float32)
    B, N, _ = xyz.shape
    npoint = new_xyz.shape[1]
    C = features.shape[1]
    r2 = np.float32(float(radius) * float(radius))
    idx = np.zeros((B, npoint, nsample), np.int64)
    for b in range(B):
        for j in range(npoint):
            cnt = 0
            for i in range(N):
                d2 = np.float32(0.0)
                for c in range(3):
                    diff = np.float32(new_xyz[b, j, c] - xyz[b, i, c])
                    d2 = np.float32(d2 + diff * diff)
                if d2 < r2:
                    if cnt == 0:
                        idx[b, j, :] = i
                    idx[b, j, cnt] = i
                    cnt += 1
                    if cnt >= nsample:
                        break
    out = np.zeros((B, 3 + C, npoint, nsample), np.float32)
    for b in range(B):
        for j in range(npoint):
            for s in range(nsample):
                i = idx[b, j, s]
                out[b, :3, j, s] = xyz[b, i] - new_xyz[b, j]
                out[b, 3:, j, s] = features[b, :, i]
    return out


if __name__ == "__main__":
    B, N, npoint, nsample, C = 2, 16, 8, 4, 4
    radius = 0.3

    key = jax.random.PRNGKey(0)
    k1, k2, k3 = jax.random.split(key, 3)
    xyz = jax.random.uniform(k1, (B, N, 3), dtype=jnp.float32)
    new_xyz = jax.random.uniform(k2, (B, npoint, 3), dtype=jnp.float32)
    features = jax.random.normal(k3, (B, C, N), dtype=jnp.float32)

    out = query_and_group(xyz, new_xyz, features, radius=radius, nsample=nsample, use_xyz=True)
    out = jax.block_until_ready(out)

    ref = _reference(radius, nsample, np.asarray(xyz), np.asarray(new_xyz), np.asarray(features))
    np.testing.assert_allclose(np.asarray(out), ref, rtol=1e-4, atol=1e-4)
    print("KERNEL_OK")
</pallas_src>

<mosaic_0001>
module attributes {stable_mosaic.version = 11 : i64} {
  func.func @_query_and_group_kernel(%arg0: i32, %arg1: i32, %arg2: memref<1x3x16xf32, #tpu.memory_space<vmem>>, %arg3: memref<1x7x16xbf16, #tpu.memory_space<vmem>>, %arg4: memref<1x7x16xbf16, #tpu.memory_space<vmem>>, %arg5: memref<1x8x3xf32, #tpu.memory_space<vmem>>, %arg6: memref<1x3x8xf32, #tpu.memory_space<vmem>>, %arg7: memref<1x7x4x8xf32, #tpu.memory_space<vmem>>) attributes {dimension_semantics = [#tpu.dimension_semantics<parallel>, #tpu.dimension_semantics<parallel>], iteration_bounds = array<i64: 2, 1>, scalar_prefetch = 0 : i64, scratch_operands = 0 : i64, tpu.core_type = #tpu.core_type<tc>, window_params = [{transform_indices = @transform_0, window_bounds = array<i64: 1, 3, 16>}, {transform_indices = @transform_1, window_bounds = array<i64: 1, 7, 16>}, {transform_indices = @transform_2, window_bounds = array<i64: 1, 7, 16>}, {transform_indices = @transform_3, window_bounds = array<i64: 1, 8, 3>}, {transform_indices = @transform_4, window_bounds = array<i64: 1, 3, 8>}, {transform_indices = @transform_5, window_bounds = array<i64: 1, 7, 4, 8>}]} {
    %c0 = arith.constant 0 : index
    %c0_0 = arith.constant 0 : index
    %c0_1 = arith.constant 0 : index
    %0 = vector.load %arg2[%c0, %c0_0, %c0_1] : memref<1x3x16xf32, #tpu.memory_space<vmem>>, vector<1x3x16xf32>
    %1 = vector.shape_cast %0 : vector<1x3x16xf32> to vector<3x16xf32>
    %c0_2 = arith.constant 0 : index
    %c0_3 = arith.constant 0 : index
    %c0_4 = arith.constant 0 : index
    %2 = vector.load %arg3[%c0_2, %c0_3, %c0_4] : memref<1x7x16xbf16, #tpu.memory_space<vmem>>, vector<1x7x16xbf16>
    %3 = vector.shape_cast %2 : vector<1x7x16xbf16> to vector<7x16xbf16>
    %c0_5 = arith.constant 0 : index
    %c0_6 = arith.constant 0 : index
    %c0_7 = arith.constant 0 : index
    %4 = vector.load %arg4[%c0_5, %c0_6, %c0_7] : memref<1x7x16xbf16, #tpu.memory_space<vmem>>, vector<1x7x16xbf16>
    %5 = vector.shape_cast %4 : vector<1x7x16xbf16> to vector<7x16xbf16>
    %c0_8 = arith.constant 0 : index
    %c0_9 = arith.constant 0 : index
    %c0_10 = arith.constant 0 : index
    %6 = vector.load %arg5[%c0_8, %c0_9, %c0_10] : memref<1x8x3xf32, #tpu.memory_space<vmem>>, vector<1x8x3xf32>
    %7 = vector.shape_cast %6 : vector<1x8x3xf32> to vector<8x3xf32>
    %c0_11 = arith.constant 0 : index
    %c0_12 = arith.constant 0 : index
    %c0_13 = arith.constant 0 : index
    %8 = vector.load %arg6[%c0_11, %c0_12, %c0_13] : memref<1x3x8xf32, #tpu.memory_space<vmem>>, vector<1x3x8xf32>
    %9 = vector.shape_cast %8 : vector<1x3x8xf32> to vector<3x8xf32>
    %cst = arith.constant 0.000000e+00 : f32
    %10 = vector.broadcast %cst : f32 to vector<8x16xf32>
    %11 = vector.extract_strided_slice %7 {offsets = [0, 0], sizes = [8, 1], strides = [1, 1]} : vector<8x3xf32> to vector<8x1xf32>
    %12 = vector.extract_strided_slice %1 {offsets = [0, 0], sizes = [1, 16], strides = [1, 1]} : vector<3x16xf32> to vector<1x16xf32>
    %13 = vector.broadcast %11 : vector<8x1xf32> to vector<8x16xf32>
    %14 = vector.broadcast %12 : vector<1x16xf32> to vector<8x16xf32>
    %15 = arith.subf %13, %14 : vector<8x16xf32>
    %16 = arith.mulf %15, %15 : vector<8x16xf32>
    %17 = arith.addf %10, %16 : vector<8x16xf32>
    %18 = vector.extract_strided_slice %7 {offsets = [0, 1], sizes = [8, 1], strides = [1, 1]} : vector<8x3xf32> to vector<8x1xf32>
    %19 = vector.extract_strided_slice %1 {offsets = [1, 0], sizes = [1, 16], strides = [1, 1]} : vector<3x16xf32> to vector<1x16xf32>
    %20 = vector.broadcast %18 : vector<8x1xf32> to vector<8x16xf32>
    %21 = vector.broadcast %19 : vector<1x16xf32> to vector<8x16xf32>
    %22 = arith.subf %20, %21 : vector<8x16xf32>
    %23 = arith.mulf %22, %22 : vector<8x16xf32>
    %24 = arith.addf %17, %23 : vector<8x16xf32>
    %25 = vector.extract_strided_slice %7 {offsets = [0, 2], sizes = [8, 1], strides = [1, 1]} : vector<8x3xf32> to vector<8x1xf32>
    %26 = vector.extract_strided_slice %1 {offsets = [2, 0], sizes = [1, 16], strides = [1, 1]} : vector<3x16xf32> to vector<1x16xf32>
    %27 = vector.broadcast %25 : vector<8x1xf32> to vector<8x16xf32>
    %28 = vector.broadcast %26 : vector<1x16xf32> to vector<8x16xf32>
    %29 = arith.subf %27, %28 : vector<8x16xf32>
    %30 = arith.mulf %29, %29 : vector<8x16xf32>
    %31 = arith.addf %24, %30 : vector<8x16xf32>
    %cst_14 = arith.constant 9.000000e-02 : f32
    %32 = vector.broadcast %cst_14 : f32 to vector<8x16xf32>
    %33 = arith.cmpf olt, %31, %32 : vector<8x16xf32>
    %34 = arith.extui %33 : vector<8x16xi1> to vector<8x16xi32>
    %35 = arith.sitofp %34 : vector<8x16xi32> to vector<8x16xf32>
    %cst_15 = arith.constant 0.000000e+00 : f32
    %36 = vector.broadcast %cst_15 : f32 to vector<8x1xf32>
    %37 = vector.extract_strided_slice %35 {offsets = [0, 0], sizes = [8, 15], strides = [1, 1]} : vector<8x16xf32> to vector<8x15xf32>
    %38 = tpu.concatenate %36, %37 in 1 : vector<8x1xf32>, vector<8x15xf32> -> vector<8x16xf32>
    %39 = arith.addf %35, %38 : vector<8x16xf32>
    %cst_16 = arith.constant 0.000000e+00 : f32
    %40 = vector.broadcast %cst_16 : f32 to vector<8x2xf32>
    %41 = vector.extract_strided_slice %39 {offsets = [0, 0], sizes = [8, 14], strides = [1, 1]} : vector<8x16xf32> to vector<8x14xf32>
    %42 = tpu.concatenate %40, %41 in 1 : vector<8x2xf32>, vector<8x14xf32> -> vector<8x16xf32>
    %43 = arith.addf %39, %42 : vector<8x16xf32>
    %cst_17 = arith.constant 0.000000e+00 : f32
    %44 = vector.broadcast %cst_17 : f32 to vector<8x4xf32>
    %45 = vector.extract_strided_slice %43 {offsets = [0, 0], sizes = [8, 12], strides = [1, 1]} : vector<8x16xf32> to vector<8x12xf32>
    %46 = tpu.concatenate %44, %45 in 1 : vector<8x4xf32>, vector<8x12xf32> -> vector<8x16xf32>
    %47 = arith.addf %43, %46 : vector<8x16xf32>
    %cst_18 = arith.constant 0.000000e+00 : f32
    %48 = vector.broadcast %cst_18 : f32 to vector<8x8xf32>
    %49 = vector.extract_strided_slice %47 {offsets = [0, 0], sizes = [8, 8], strides = [1, 1]} : vector<8x16xf32> to vector<8x8xf32>
    %50 = tpu.concatenate %48, %49 in 1 : vector<8x8xf32>, vector<8x8xf32> -> vector<8x16xf32>
    %51 = arith.addf %47, %50 : vector<8x16xf32>
    %52 = arith.subf %51, %35 : vector<8x16xf32>
    %53 = vector.extract_strided_slice %51 {offsets = [0, 15], sizes = [8, 1], strides = [1, 1]} : vector<8x16xf32> to vector<8x1xf32>
    %54 = tpu.iota {dimensions = array<i32: 1>} : vector<1x16xi32>
    %c0_i32 = arith.constant 0 : i32
    %55 = vector.broadcast %c0_i32 : i32 to vector<1x16xi32>
    %56 = arith.cmpi eq, %54, %55 : vector<1x16xi32>
    %57 = arith.extui %56 : vector<1x16xi1> to vector<1x16xi32>
    %58 = arith.sitofp %57 : vector<1x16xi32> to vector<1x16xf32>
    %cst_19 = arith.constant 0.000000e+00 : f32
    %59 = vector.broadcast %cst_19 : f32 to vector<8x1xf32>
    %60 = arith.cmpf ole, %53, %59 : vector<8x1xf32>
    %61 = arith.extui %60 : vector<8x1xi1> to vector<8x1xi32>
    %62 = arith.sitofp %61 : vector<8x1xi32> to vector<8x1xf32>
    %63 = vector.broadcast %62 : vector<8x1xf32> to vector<8x16xf32>
    %64 = vector.broadcast %58 : vector<1x16xf32> to vector<8x16xf32>
    %65 = arith.mulf %63, %64 : vector<8x16xf32>
    %cst_20 = arith.constant 0.000000e+00 : f32
    %66 = vector.broadcast %cst_20 : f32 to vector<8x1xf32>
    %67 = arith.cmpf ogt, %53, %66 : vector<8x1xf32>
    %cst_21 = arith.constant 0.000000e+00 : f32
    %cst_22 = arith.constant 0.000000e+00 : f32
    %68 = vector.broadcast %cst_21 : f32 to vector<8x1xf32>
    %69 = vector.broadcast %cst_22 : f32 to vector<8x1xf32>
    %70 = arith.select %67, %68, %69 : vector<8x1xi1>, vector<8x1xf32>
    %cst_23 = arith.constant 1.000000e+00 : f32
    %71 = vector.broadcast %cst_23 : f32 to vector<8x1xf32>
    %72 = arith.cmpf ogt, %53, %71 : vector<8x1xf32>
    %cst_24 = arith.constant 1.000000e+00 : f32
    %cst_25 = arith.constant 0.000000e+00 : f32
    %73 = vector.broadcast %cst_24 : f32 to vector<8x1xf32>
    %74 = vector.broadcast %cst_25 : f32 to vector<8x1xf32>
    %75 = arith.select %72, %73, %74 : vector<8x1xi1>, vector<8x1xf32>
    %cst_26 = arith.constant 2.000000e+00 : f32
    %76 = vector.broadcast %cst_26 : f32 to vector<8x1xf32>
    %77 = arith.cmpf ogt, %53, %76 : vector<8x1xf32>
    %cst_27 = arith.constant 2.000000e+00 : f32
    %cst_28 = arith.constant 0.000000e+00 : f32
    %78 = vector.broadcast %cst_27 : f32 to vector<8x1xf32>
    %79 = vector.broadcast %cst_28 : f32 to vector<8x1xf32>
    %80 = arith.select %77, %78, %79 : vector<8x1xi1>, vector<8x1xf32>
    %cst_29 = arith.constant 3.000000e+00 : f32
    %81 = vector.broadcast %cst_29 : f32 to vector<8x1xf32>
    %82 = arith.cmpf ogt, %53, %81 : vector<8x1xf32>
    %cst_30 = arith.constant 3.000000e+00 : f32
    %cst_31 = arith.constant 0.000000e+00 : f32
    %83 = vector.broadcast %cst_30 : f32 to vector<8x1xf32>
    %84 = vector.broadcast %cst_31 : f32 to vector<8x1xf32>
    %85 = arith.select %82, %83, %84 : vector<8x1xi1>, vector<8x1xf32>
    %86 = vector.shape_cast %70 : vector<8x1xf32> to vector<1x8x1xf32>
    %87 = vector.shape_cast %75 : vector<8x1xf32> to vector<1x8x1xf32>
    %88 = vector.shape_cast %80 : vector<8x1xf32> to vector<1x8x1xf32>
    %89 = vector.shape_cast %85 : vector<8x1xf32> to vector<1x8x1xf32>
    %90 = tpu.concatenate %86, %87, %88, %89 in 0 : vector<1x8x1xf32>, vector<1x8x1xf32>, vector<1x8x1xf32>, vector<1x8x1xf32> -> vector<4x8x1xf32>
    %91 = vector.shape_cast %52 : vector<8x16xf32> to vector<1x8x16xf32>
    %92 = vector.broadcast %91 : vector<1x8x16xf32> to vector<4x8x16xf32>
    %93 = vector.broadcast %90 : vector<4x8x1xf32> to vector<4x8x16xf32>
    %94 = arith.cmpf oeq, %92, %93 : vector<4x8x16xf32>
    %95 = vector.shape_cast %35 : vector<8x16xf32> to vector<1x8x16xf32>
    %cst_32 = arith.constant 0.000000e+00 : f32
    %96 = vector.shape_cast %95 : vector<1x8x16xf32> to vector<1x8x16xf32>
    %97 = vector.broadcast %96 : vector<1x8x16xf32> to vector<4x8x16xf32>
    %98 = vector.broadcast %cst_32 : f32 to vector<4x8x16xf32>
    %99 = arith.select %94, %97, %98 : vector<4x8x16xi1>, vector<4x8x16xf32>
    %100 = vector.shape_cast %65 : vector<8x16xf32> to vector<1x8x16xf32>
    %101 = vector.broadcast %100 : vector<1x8x16xf32> to vector<4x8x16xf32>
    %102 = arith.addf %99, %101 : vector<4x8x16xf32>
    %103 = vector.shape_cast %102 : vector<4x8x16xf32> to vector<32x16xf32>
    %104 = arith.truncf %103 : vector<32x16xf32> to vector<32x16xbf16>
    %cst_33 = arith.constant dense<0.000000e+00> : vector<7x32xf32>
    %105 = tpu.matmul %3, %104, %cst_33 {dimension_numbers = #tpu.dot_dimension_numbers<[1], [1], [0], [0], [0, 0, 1, 0], [], []>} : vector<7x16xbf16>, vector<32x16xbf16>, vector<7x32xf32> -> vector<7x32xf32>
    %cst_34 = arith.constant dense<0.000000e+00> : vector<7x32xf32>
    %106 = tpu.matmul %5, %104, %cst_34 {dimension_numbers = #tpu.dot_dimension_numbers<[1], [1], [0], [0], [0, 0, 1, 0], [], []>} : vector<7x16xbf16>, vector<32x16xbf16>, vector<7x32xf32> -> vector<7x32xf32>
    %107 = arith.addf %105, %106 : vector<7x32xf32>
    %108 = vector.extract_strided_slice %107 {offsets = [0, 0], sizes = [3, 8], strides = [1, 1]} : vector<7x32xf32> to vector<3x8xf32>
    %109 = arith.subf %108, %9 : vector<3x8xf32>
    %c0_35 = arith.constant 0 : index
    %c0_36 = arith.constant 0 : index
    %c0_37 = arith.constant 0 : index
    %c0_38 = arith.constant 0 : index
    %110 = vector.load %arg7[%c0_35, %c0_36, %c0_37, %c0_38] : memref<1x7x4x8xf32, #tpu.memory_space<vmem>>, vector<1x3x1x8xf32>
    %111 = vector.shape_cast %110 : vector<1x3x1x8xf32> to vector<3x8xf32>
    %112 = vector.shape_cast %109 : vector<3x8xf32> to vector<1x3x1x8xf32>
    tpu.vector_store %arg7[%c0_35, %c0_36, %c0_37, %c0_38], %112 {strides = array<i32>} : memref<1x7x4x8xf32, #tpu.memory_space<vmem>>, vector<1x3x1x8xf32>,
    %113 = vector.extract_strided_slice %107 {offsets = [3, 0], sizes = [4, 8], strides = [1, 1]} : vector<7x32xf32> to vector<4x8xf32>
    %c0_39 = arith.constant 0 : index
    %c3 = arith.constant 3 : index
    %c0_40 = arith.constant 0 : index
    %c0_41 = arith.constant 0 : index
    %114 = vector.load %arg7[%c0_39, %c3, %c0_40, %c0_41] : memref<1x7x4x8xf32, #tpu.memory_space<vmem>>, vector<1x4x1x8xf32>
    %115 = vector.shape_cast %114 : vector<1x4x1x8xf32> to vector<4x8xf32>
    %116 = vector.shape_cast %113 : vector<4x8xf32> to vector<1x4x1x8xf32>
    tpu.vector_store %arg7[%c0_39, %c3, %c0_40, %c0_41], %116 {strides = array<i32>} : memref<1x7x4x8xf32, #tpu.memory_space<vmem>>, vector<1x4x1x8xf32>,
    %117 = vector.extract_strided_slice %107 {offsets = [0, 8], sizes = [3, 8], strides = [1, 1]} : vector<7x32xf32> to vector<3x8xf32>
    %118 = arith.subf %117, %9 : vector<3x8xf32>
    %c0_42 = arith.constant 0 : index
    %c0_43 = arith.constant 0 : index
    %c1 = arith.constant 1 : index
    %c0_44 = arith.constant 0 : index
    %119 = vector.load %arg7[%c0_42, %c0_43, %c1, %c0_44] : memref<1x7x4x8xf32, #tpu.memory_space<vmem>>, vector<1x3x1x8xf32>
    %120 = vector.shape_cast %119 : vector<1x3x1x8xf32> to vector<3x8xf32>
    %121 = vector.shape_cast %118 : vector<3x8xf32> to vector<1x3x1x8xf32>
    tpu.vector_store %arg7[%c0_42, %c0_43, %c1, %c0_44], %121 {strides = array<i32>} : memref<1x7x4x8xf32, #tpu.memory_space<vmem>>, vector<1x3x1x8xf32>,
    %122 = vector.extract_strided_slice %107 {offsets = [3, 8], sizes = [4, 8], strides = [1, 1]} : vector<7x32xf32> to vector<4x8xf32>
    %c0_45 = arith.constant 0 : index
    %c3_46 = arith.constant 3 : index
    %c1_47 = arith.constant 1 : index
    %c0_48 = arith.constant 0 : index
    %123 = vector.load %arg7[%c0_45, %c3_46, %c1_47, %c0_48] : memref<1x7x4x8xf32, #tpu.memory_space<vmem>>, vector<1x4x1x8xf32>
    %124 = vector.shape_cast %123 : vector<1x4x1x8xf32> to vector<4x8xf32>
    %125 = vector.shape_cast %122 : vector<4x8xf32> to vector<1x4x1x8xf32>
    tpu.vector_store %arg7[%c0_45, %c3_46, %c1_47, %c0_48], %125 {strides = array<i32>} : memref<1x7x4x8xf32, #tpu.memory_space<vmem>>, vector<1x4x1x8xf32>,
    %126 = vector.extract_strided_slice %107 {offsets = [0, 16], sizes = [3, 8], strides = [1, 1]} : vector<7x32xf32> to vector<3x8xf32>
    %127 = arith.subf %126, %9 : vector<3x8xf32>
    %c0_49 = arith.constant 0 : index
    %c0_50 = arith.constant 0 : index
    %c2 = arith.constant 2 : index
    %c0_51 = arith.constant 0 : index
    %128 = vector.load %arg7[%c0_49, %c0_50, %c2, %c0_51] : memref<1x7x4x8xf32, #tpu.memory_space<vmem>>, vector<1x3x1x8xf32>
    %129 = vector.shape_cast %128 : vector<1x3x1x8xf32> to vector<3x8xf32>
    %130 = vector.shape_cast %127 : vector<3x8xf32> to vector<1x3x1x8xf32>
    tpu.vector_store %arg7[%c0_49, %c0_50, %c2, %c0_51], %130 {strides = array<i32>} : memref<1x7x4x8xf32, #tpu.memory_space<vmem>>, vector<1x3x1x8xf32>,
    %131 = vector.extract_strided_slice %107 {offsets = [3, 16], sizes = [4, 8], strides = [1, 1]} : vector<7x32xf32> to vector<4x8xf32>
    %c0_52 = arith.constant 0 : index
    %c3_53 = arith.constant 3 : index
    %c2_54 = arith.constant 2 : index
    %c0_55 = arith.constant 0 : index
    %132 = vector.load %arg7[%c0_52, %c3_53, %c2_54, %c0_55] : memref<1x7x4x8xf32, #tpu.memory_space<vmem>>, vector<1x4x1x8xf32>
    %133 = vector.shape_cast %132 : vector<1x4x1x8xf32> to vector<4x8xf32>
    %134 = vector.shape_cast %131 : vector<4x8xf32> to vector<1x4x1x8xf32>
    tpu.vector_store %arg7[%c0_52, %c3_53, %c2_54, %c0_55], %134 {strides = array<i32>} : memref<1x7x4x8xf32, #tpu.memory_space<vmem>>, vector<1x4x1x8xf32>,
    %135 = vector.extract_strided_slice %107 {offsets = [0, 24], sizes = [3, 8], strides = [1, 1]} : vector<7x32xf32> to vector<3x8xf32>
    %136 = arith.subf %135, %9 : vector<3x8xf32>
    %c0_56 = arith.constant 0 : index
    %c0_57 = arith.constant 0 : index
    %c3_58 = arith.constant 3 : index
    %c0_59 = arith.constant 0 : index
    %137 = vector.load %arg7[%c0_56, %c0_57, %c3_58, %c0_59] : memref<1x7x4x8xf32, #tpu.memory_space<vmem>>, vector<1x3x1x8xf32>
    %138 = vector.shape_cast %137 : vector<1x3x1x8xf32> to vector<3x8xf32>
    %139 = vector.shape_cast %136 : vector<3x8xf32> to vector<1x3x1x8xf32>
    tpu.vector_store %arg7[%c0_56, %c0_57, %c3_58, %c0_59], %139 {strides = array<i32>} : memref<1x7x4x8xf32, #tpu.memory_space<vmem>>, vector<1x3x1x8xf32>,
    %140 = vector.extract_strided_slice %107 {offsets = [3, 24], sizes = [4, 8], strides = [1, 1]} : vector<7x32xf32> to vector<4x8xf32>
    %c0_60 = arith.constant 0 : index
    %c3_61 = arith.constant 3 : index
    %c3_62 = arith.constant 3 : index
    %c0_63 = arith.constant 0 : index
    %141 = vector.load %arg7[%c0_60, %c3_61, %c3_62, %c0_63] : memref<1x7x4x8xf32, #tpu.memory_space<vmem>>, vector<1x4x1x8xf32>
    %142 = vector.shape_cast %141 : vector<1x4x1x8xf32> to vector<4x8xf32>
    %143 = vector.shape_cast %140 : vector<4x8xf32> to vector<1x4x1x8xf32>
    tpu.vector_store %arg7[%c0_60, %c3_61, %c3_62, %c0_63], %143 {strides = array<i32>} : memref<1x7x4x8xf32, #tpu.memory_space<vmem>>, vector<1x4x1x8xf32>,
    return
  }
  func.func @transform_0(%arg0: i32, %arg1: i32) -> (i32, i32, i32) {
    %c0_i32 = arith.constant 0 : i32
    %c0_i32_0 = arith.constant 0 : i32
    %c0_i32_1 = arith.constant 0 : i32
    return %arg0, %c0_i32, %c0_i32_0 : i32, i32, i32
  }
  func.func @transform_1(%arg0: i32, %arg1: i32) -> (i32, i32, i32) {
    %c0_i32 = arith.constant 0 : i32
    %c0_i32_0 = arith.constant 0 : i32
    %c0_i32_1 = arith.constant 0 : i32
    return %arg0, %c0_i32, %c0_i32_0 : i32, i32, i32
  }
  func.func @transform_2(%arg0: i32, %arg1: i32) -> (i32, i32, i32) {
    %c0_i32 = arith.constant 0 : i32
    %c0_i32_0 = arith.constant 0 : i32
    %c0_i32_1 = arith.constant 0 : i32
    return %arg0, %c0_i32, %c0_i32_0 : i32, i32, i32
  }
  func.func @transform_3(%arg0: i32, %arg1: i32) -> (i32, i32, i32) {
    %c0_i32 = arith.constant 0 : i32
    %c0_i32_0 = arith.constant 0 : i32
    return %arg0, %arg1, %c0_i32 : i32, i32, i32
  }
  func.func @transform_4(%arg0: i32, %arg1: i32) -> (i32, i32, i32) {
    %c0_i32 = arith.constant 0 : i32
    %c0_i32_0 = arith.constant 0 : i32
    return %arg0, %c0_i32, %arg1 : i32, i32, i32
  }
  func.func @transform_5(%arg0: i32, %arg1: i32) -> (i32, i32, i32, i32) {
    %c0_i32 = arith.constant 0 : i32
    %c0_i32_0 = arith.constant 0 : i32
    %c0_i32_1 = arith.constant 0 : i32
    return %arg0, %c0_i32, %c0_i32_0, %arg1 : i32, i32, i32, i32
  }
}

</mosaic_0001>

<llo_original>
// kernel: tpu_custom_call.1
$region0: #{tpu_custom_call.1}
  #allocation0 [shape = 'u32[]', space=smem, size = 0x4, offset = 0x4, fixed_abs, tag = 'smem constant byte address 0x4 - core index']
  #allocation1 [shape = 'u32[72,128]{1,0:T(1,128)}', space=vmem, size = 0x9000, scoped, tag = 'internal scratch']
  %s0 = inlined_call_operand.vmem [shape: f32[2,3,16], index: 0, kind: input, shape index: {}]
  %s1 = inlined_call_operand.vmem [shape: bf16[2,7,16], index: 1, kind: input, shape index: {}]
  %s2 = inlined_call_operand.vmem [shape: bf16[2,7,16], index: 2, kind: input, shape index: {}]
  %s3 = inlined_call_operand.vmem [shape: f32[2,8,3], index: 3, kind: input, shape index: {}]
  %s4 = inlined_call_operand.vmem [shape: f32[2,3,8], index: 4, kind: input, shape index: {}]
  %s5 = inlined_call_operand.hbm [shape: f32[2,7,4,8], index: 5, kind: output, shape index: {}]
  %s6 = sld [smem:[#allocation0]]
  $region53: #{tpu_custom_call.1} parent=0
    _
  %s8 = ssub.s32 1, %s6
  %s9 = scalar_select 0, %s8, %s6
  $region1: #{tpu_custom_call.1} parent=0
    #allocation2 [shape = 'u8[28672]{0}', space=vmem, size = 0x7000, scoped, tag = 'output window, operand 0']
    #allocation3 [shape = 's32[2]{0}', space=sflag, size = 0x8, scoped, tag = 'scoped memory for tpu_custom_call.1']
    %10 = vsyncpa [#allocation3], 0
    %s11 = scalar_lea.sflag [#allocation3], 1
    %12 = vsyncpa %s11, 0
    loop: start=0, step=1, limit=4
    $region2: #{tpu_custom_call.1} parent=1 // loop_pre_header
      _
    $region3: #{tpu_custom_call.1} parent=1 // loop_header
      %s14 = sphi 0, %s18
      %p15 = scmp.ge.s32.totalorder %s14, 4
      %s21 = sphi 0, %s33
      %s22 = sphi 0, %s29
      %s23 = sphi 0, %s21
      %s24 = sphi 0, %s22
      %s25 = sphi 0, %s23
      %s26 = sphi 0, %s24
      %s36 = sphi 0, %s38
      %s39 = sphi 0, %s36
      %s40 = sphi 0, %s39
      %s56 = sphi 0, %s40
      %s62 = sphi 0, %s64
      %s65 = sphi 0, %s62
      %s66 = sphi 0, %s65
      %s82 = sphi 0, %s66
      %s88 = sphi 0, %s90
      %s91 = sphi 0, %s88
      %s92 = sphi 0, %s91
      %s108 = sphi 0, %s92
      %s116 = sphi 0, %s118
      %s119 = sphi 0, %s116
      %s120 = sphi 0, %s119
      %s136 = sphi 0, %s120
      %s144 = sphi 0, %s146
      %s147 = sphi 0, %s144
      %s148 = sphi 0, %s147
      %s164 = sphi 0, %s148
      %s172 = sphi 0, %s174
      %s175 = sphi 0, %s172
      %s176 = sphi 0, %s175
      %s192 = sphi 0, %s176
    $region4: #{tpu_custom_call.1} parent=1 // loop_header_branch
      %17 = sbr.rel (%p15) target = $region8
    $region5: #{tpu_custom_call.1} parent=1 // loop_body
      %s19 = ssub.s32 %s14, 1
      %s20 = ssub.s32 %s14, 2
      %s27 = sadd.s32 1, %s22
      %p28 = scmp.ge.s32.totalorder %s27, 1
      %s29 = scalar_select %p28, 0, %s27
      %s30 = sadd.s32 1, %s21
      %s31 = scalar_select %p28, %s30, %s21
      %p32 = scmp.ge.s32.totalorder %s31, 2
      %s33 = scalar_select %p32, 0, %s31
      %s34 = ssub.s32 %s21, %s33
      %p35 = scmp.eq.s32.totalorder %s34, 0
      %s37 = sadd.s32 %s36, 1
      %s38 = scalar_select %p35, %s36, %s37
      %p41 = pneg %p35
      %p42 = scmp.eq.s32.totalorder %s14, 1
      %p43 = por %p41, %p42
      %p44 = scmp.ne.s32.totalorder %s36, %s39
      %p45 = scmp.eq.s32.totalorder %s14, 0
      %p46 = por %p44, %p45
      %p47 = scmp.ne.s32.totalorder %s36, %s39
      %p48 = scmp.eq.s32.totalorder %s19, 1
      %p49 = por %p47, %p48
      %p50 = scmp.ne.s32.totalorder %s39, %s40
      %p51 = scmp.eq.s32.totalorder %s19, 0
      %p52 = por %p50, %p51
      %p53 = scmp.ne.s32.totalorder %s39, %s40
      %p54 = scmp.eq.s32.totalorder %s20, 1
      %p55 = por %p53, %p54
      %p57 = scmp.ne.s32.totalorder %s40, %s56
      %p58 = scmp.eq.s32.totalorder %s20, 0
      %p59 = por %p57, %p58
      %s60 = ssub.s32 %s21, %s33
      %p61 = scmp.eq.s32.totalorder %s60, 0
      %s63 = sadd.s32 %s62, 1
      %s64 = scalar_select %p61, %s62, %s63
      %p67 = pneg %p61
      %p68 = scmp.eq.s32.totalorder %s14, 1
      %p69 = por %p67, %p68
      %p70 = scmp.ne.s32.totalorder %s62, %s65
      %p71 = scmp.eq.s32.totalorder %s14, 0
      %p72 = por %p70, %p71
      %p73 = scmp.ne.s32.totalorder %s62, %s65
      %p74 = scmp.eq.s32.totalorder %s19, 1
      %p75 = por %p73, %p74
      %p76 = scmp.ne.s32.totalorder %s65, %s66
      %p77 = scmp.eq.s32.totalorder %s19, 0
      %p78 = por %p76, %p77
      %p79 = scmp.ne.s32.totalorder %s65, %s66
      %p80 = scmp.eq.s32.totalorder %s20, 1
      %p81 = por %p79, %p80
      %p83 = scmp.ne.s32.totalorder %s66, %s82
      %p84 = scmp.eq.s32.totalorder %s20, 0
      %p85 = por %p83, %p84
      %s86 = ssub.s32 %s21, %s33
      %p87 = scmp.eq.s32.totalorder %s86, 0
      %s89 = sadd.s32 %s88, 1
      %s90 = scalar_select %p87, %s88, %s89
      %p93 = pneg %p87
      %p94 = scmp.eq.s32.totalorder %s14, 1
      %p95 = por %p93, %p94
      %p96 = scmp.ne.s32.totalorder %s88, %s91
      %p97 = scmp.eq.s32.totalorder %s14, 0
      %p98 = por %p96, %p97
      %p99 = scmp.ne.s32.totalorder %s88, %s91
      %p100 = scmp.eq.s32.totalorder %s19, 1
      %p101 = por %p99, %p100
      %p102 = scmp.ne.s32.totalorder %s91, %s92
      %p103 = scmp.eq.s32.totalorder %s19, 0
      %p104 = por %p102, %p103
      %p105 = scmp.ne.s32.totalorder %s91, %s92
      %p106 = scmp.eq.s32.totalorder %s20, 1
      %p107 = por %p105, %p106
      %p109 = scmp.ne.s32.totalorder %s92, %s108
      %p110 = scmp.eq.s32.totalorder %s20, 0
      %p111 = por %p109, %p110
      %s112 = ssub.s32 %s21, %s33
      %s113 = ssub.s32 %s22, %s29
      %s114 = sor.u32 %s112, %s113
      %p115 = scmp.eq.s32.totalorder %s114, 0
      %s117 = sadd.s32 %s116, 1
      %s118 = scalar_select %p115, %s116, %s117
      %p121 = pneg %p115
      %p122 = scmp.eq.s32.totalorder %s14, 1
      %p123 = por %p121, %p122
      %p124 = scmp.ne.s32.totalorder %s116, %s119
      %p125 = scmp.eq.s32.totalorder %s14, 0
      %p126 = por %p124, %p125
      %p127 = scmp.ne.s32.totalorder %s116, %s119
      %p128 = scmp.eq.s32.totalorder %s19, 1
      %p129 = por %p127, %p128
      %p130 = scmp.ne.s32.totalorder %s119, %s120
      %p131 = scmp.eq.s32.totalorder %s19, 0
      %p132 = por %p130, %p131
      %p133 = scmp.ne.s32.totalorder %s119, %s120
      %p134 = scmp.eq.s32.totalorder %s20, 1
      %p135 = por %p133, %p134
      %p137 = scmp.ne.s32.totalorder %s120, %s136
      %p138 = scmp.eq.s32.totalorder %s20, 0
      %p139 = por %p137, %p138
      %s140 = ssub.s32 %s21, %s33
      %s141 = ssub.s32 %s22, %s29
      %s142 = sor.u32 %s140, %s141
      %p143 = scmp.eq.s32.totalorder %s142, 0
      %s145 = sadd.s32 %s144, 1
      %s146 = scalar_select %p143, %s144, %s145
      %p149 = pneg %p143
      %p150 = scmp.eq.s32.totalorder %s14, 1
      %p151 = por %p149, %p150
      %p152 = scmp.ne.s32.totalorder %s144, %s147
      %p153 = scmp.eq.s32.totalorder %s14, 0
      %p154 = por %p152, %p153
      %p155 = scmp.ne.s32.totalorder %s144, %s147
      %p156 = scmp.eq.s32.totalorder %s19, 1
      %p157 = por %p155, %p156
      %p158 = scmp.ne.s32.totalorder %s147, %s148
      %p159 = scmp.eq.s32.totalorder %s19, 0
      %p160 = por %p158, %p159
      %p161 = scmp.ne.s32.totalorder %s147, %s148
      %p162 = scmp.eq.s32.totalorder %s20, 1
      %p163 = por %p161, %p162
      %p165 = scmp.ne.s32.totalorder %s148, %s164
      %p166 = scmp.eq.s32.totalorder %s20, 0
      %p167 = por %p165, %p166
      %s168 = ssub.s32 %s21, %s33
      %s169 = ssub.s32 %s22, %s29
      %s170 = sor.u32 %s168, %s169
      %p171 = scmp.eq.s32.totalorder %s170, 0
      %s173 = sadd.s32 %s172, 1
      %s174 = scalar_select %p171, %s172, %s173
      %p177 = pneg %p171
      %p178 = scmp.eq.s32.totalorder %s14, 1
      %p179 = por %p177, %p178
      %p180 = scmp.ne.s32.totalorder %s172, %s175
      %p181 = scmp.eq.s32.totalorder %s14, 0
      %p182 = por %p180, %p181
      %p183 = scmp.ne.s32.totalorder %s172, %s175
      %p184 = scmp.eq.s32.totalorder %s19, 1
      %p185 = por %p183, %p184
      %p186 = scmp.ne.s32.totalorder %s175, %s176
      %p187 = scmp.eq.s32.totalorder %s19, 0
      %p188 = por %p186, %p187
      %p189 = scmp.ne.s32.totalorder %s175, %s176
      %p190 = scmp.eq.s32.totalorder %s20, 1
      %p191 = por %p189, %p190
      %p193 = scmp.ne.s32.totalorder %s176, %s192
      %p194 = scmp.eq.s32.totalorder %s20, 0
      %p195 = por %p193, %p194
      %p196 = scmp.le.s32.totalorder 1, %s14
      %p197 = scmp.lt.s32.totalorder %s14, 3
      %p198 = pnand %p196, %p197
      %p199 = pneg %p198
      // Predicated region
      $region9: #{tpu_custom_call.1} parent=5 // pred_check
        _
      $region10: #{tpu_custom_call.1} parent=5 // pred_check_branch
        %201 = sbr.rel (%p198) target = $region12
      $region11: #{tpu_custom_call.1} parent=5 // pred_region
        %s202 = ssub.s32 %s14, 1
      $region12: #{tpu_custom_call.1} parent=5 // pred_fallthru
        _
      %p203 = scmp.lt.s32.totalorder %s14, 2
      // Predicated region
      $region13: #{tpu_custom_call.1} parent=5 // pred_check
        %p204 = pneg %p203
      $region14: #{tpu_custom_call.1} parent=5 // pred_check_branch
        %206 = sbr.rel (%p204) target = $region16
      $region15: #{tpu_custom_call.1} parent=5 // pred_region
        // Predicated region
        $region17: #{tpu_custom_call.1} parent=15 // pred_check
          %p207 = pneg %p46
        $region18: #{tpu_custom_call.1} parent=15 // pred_check_branch
          %209 = sbr.rel (%p207) target = $region20
        $region19: #{tpu_custom_call.1} parent=15 // pred_region
          %p210 = scmp.lt.s32.totalorder %s21, 1
          %s211 = scalar_select %p210, %s21, 1
          %s212 = smul.addr %s211, 4
          %s213 = scalar_lea.vmem %s0, %s212
        $region20: #{tpu_custom_call.1} parent=15 // pred_fallthru
          _
        // Predicated region
        $region21: #{tpu_custom_call.1} parent=15 // pred_check
          %p214 = pneg %p72
        $region22: #{tpu_custom_call.1} parent=15 // pred_check_branch
          %216 = sbr.rel (%p214) target = $region24
        $region23: #{tpu_custom_call.1} parent=15 // pred_region
          %p217 = scmp.lt.s32.totalorder %s21, 1
          %s218 = scalar_select %p217, %s21, 1
          %s219 = smul.addr %s218, 4
          %s220 = scalar_lea.vmem %s1, %s219
        $region24: #{tpu_custom_call.1} parent=15 // pred_fallthru
          _
        // Predicated region
        $region25: #{tpu_custom_call.1} parent=15 // pred_check
          %p221 = pneg %p98
        $region26: #{tpu_custom_call.1} parent=15 // pred_check_branch
          %223 = sbr.rel (%p221) target = $region28
        $region27: #{tpu_custom_call.1} parent=15 // pred_region
          %p224 = scmp.lt.s32.totalorder %s21, 1
          %s225 = scalar_select %p224, %s21, 1
          %s226 = smul.addr %s225, 4
          %s227 = scalar_lea.vmem %s2, %s226
        $region28: #{tpu_custom_call.1} parent=15 // pred_fallthru
          _
        // Predicated region
        $region29: #{tpu_custom_call.1} parent=15 // pred_check
          %p228 = pneg %p126
        $region30: #{tpu_custom_call.1} parent=15 // pred_check_branch
          %230 = sbr.rel (%p228) target = $region32
        $region31: #{tpu_custom_call.1} parent=15 // pred_region
          %p231 = scmp.lt.s32.totalorder %s21, 1
          %s232 = scalar_select %p231, %s21, 1
          %p233 = scmp.lt.s32.totalorder %s22, 0
          %s234 = scalar_select %p233, %s22, 0
          %s235 = sadd.s32 %s234, %s232
          %s236 = smul.addr %s235, 8
          %s237 = scalar_lea.vmem %s3, %s236
        $region32: #{tpu_custom_call.1} parent=15 // pred_fallthru
          _
        // Predicated region
        $region33: #{tpu_custom_call.1} parent=15 // pred_check
          %p238 = pneg %p154
        $region34: #{tpu_custom_call.1} parent=15 // pred_check_branch
          %240 = sbr.rel (%p238) target = $region36
        $region35: #{tpu_custom_call.1} parent=15 // pred_region
          %p241 = scmp.lt.s32.totalorder %s21, 1
          %s242 = scalar_select %p241, %s21, 1
          %p243 = scmp.lt.s32.totalorder %s22, 0
          %s244 = scalar_select %p243, %s22, 0
          %s245 = sadd.s32 %s244, %s242
          %s246 = smul.addr %s245, 4
          %s247 = scalar_lea.vmem %s4, %s246
        $region36: #{tpu_custom_call.1} parent=15 // pred_fallthru
          _
      $region16: #{tpu_custom_call.1} parent=5 // pred_fallthru
        _
      %p248 = scmp.le.s32.totalorder 1, %s14
      %p249 = scmp.lt.s32.totalorder %s14, 3
      %p250 = pnand %p248, %p249
      %p251 = pneg %p250
      // Predicated region
      $region37: #{tpu_custom_call.1} parent=5 // pred_check
        _
      $region38: #{tpu_custom_call.1} parent=5 // pred_check_branch
        %253 = sbr.rel (%p250) target = $region40
      $region39: #{tpu_custom_call.1} parent=5 // pred_region
        %s254 = ssub.s32 %s14, 1
        %p255 = scmp.lt.s32.totalorder %s23, 1
        %s256 = scalar_select %p255, %s23, 1
        %s257 = smul.addr %s256, 4
        %s258 = scalar_lea.vmem %s0, %s257
        %p259 = pneg %p52
        %p260 = pneg %p49
        %p261 = scmp.lt.s32.totalorder %s23, 1
        %s262 = scalar_select %p261, %s23, 1
        %s263 = smul.addr %s262, 4
        %s264 = scalar_lea.vmem %s1, %s263
        %p265 = pneg %p78
        %p266 = pneg %p75
        %p267 = scmp.lt.s32.totalorder %s23, 1
        %s268 = scalar_select %p267, %s23, 1
        %s269 = smul.addr %s268, 4
        %s270 = scalar_lea.vmem %s2, %s269
        %p271 = pneg %p104
        %p272 = pneg %p101
        %p273 = scmp.lt.s32.totalorder %s23, 1
        %s274 = scalar_select %p273, %s23, 1
        %p275 = scmp.lt.s32.totalorder %s24, 0
        %s276 = scalar_select %p275, %s24, 0
        %s277 = sadd.s32 %s276, %s274
        %s278 = smul.addr %s277, 8
        %s279 = scalar_lea.vmem %s3, %s278
        %p280 = pneg %p132
        %p281 = pneg %p129
        %p282 = scmp.lt.s32.totalorder %s23, 1
        %s283 = scalar_select %p282, %s23, 1
        %p284 = scmp.lt.s32.totalorder %s24, 0
        %s285 = scalar_select %p284, %s24, 0
        %s286 = sadd.s32 %s285, %s283
        %s287 = smul.addr %s286, 4
        %s288 = scalar_lea.vmem %s4, %s287
        %p289 = pneg %p160
        %p290 = pneg %p157
        %p291 = pneg %p188
        %p292 = pneg %p185
        %s293 = sand.u32 %s175, 1
        %s294 = scalar_lea.sflag [#allocation3], %s293
        %s295 = sand.u32 %s175, 1
        %s296 = smul.addr %s295, 28
        %s297 = scalar_lea.vmem [#allocation2], %s296
        %p298 = scmp.lt.s32.totalorder %s23, 1
        %s299 = scalar_select %p298, %s23, 1
        %s300 = smul.addr %s299, 4
        %s301 = scalar_lea.vmem %s0, %s300
        %p302 = scmp.lt.s32.totalorder %s23, 1
        %s303 = scalar_select %p302, %s23, 1
        %s304 = smul.addr %s303, 4
        %s305 = scalar_lea.vmem %s1, %s304
        %p306 = scmp.lt.s32.totalorder %s23, 1
        %s307 = scalar_select %p306, %s23, 1
        %s308 = smul.addr %s307, 4
        %s309 = scalar_lea.vmem %s2, %s308
        %p310 = scmp.lt.s32.totalorder %s23, 1
        %s311 = scalar_select %p310, %s23, 1
        %p312 = scmp.lt.s32.totalorder %s24, 0
        %s313 = scalar_select %p312, %s24, 0
        %s314 = sadd.s32 %s313, %s311
        %s315 = smul.addr %s314, 8
        %s316 = scalar_lea.vmem %s3, %s315
        %p317 = scmp.lt.s32.totalorder %s23, 1
        %s318 = scalar_select %p317, %s23, 1
        %p319 = scmp.lt.s32.totalorder %s24, 0
        %s320 = scalar_select %p319, %s24, 0
        %s321 = sadd.s32 %s320, %s318
        %s322 = smul.addr %s321, 4
        %s323 = scalar_lea.vmem %s4, %s322
        %v325 = vld [vmem:[%s301] sm:$0x7]
        %v326 = vld [vmem:[%s305] sm:$0xf]
        %v327 = vld [vmem:[%s309] sm:$0xf]
        %v328 = vld [vmem:[%s316] sm:$0xff]
        %v329 = vld [vmem:[%s323] sm:$0x7]
        %331 = vset.pattern.permute.xlu0 0
        %332 = vperm.xlu0 %331, %v328
        %v333 = vpop.permute.xlu0 %332
        %v335 = vperm.slane %v325, 0
        %v336 = vsub.f32 %v333, %v335
        %v337 = vmul.f32 %v336, %v336
        %v338 = vadd.f32 %v337, 0.0
        %339 = vset.pattern.permute.xlu0 1
        %340 = vperm.xlu0 %339, %v328
        %v341 = vpop.permute.xlu0 %340
        %v343 = vperm.slane %v325, 1
        %v344 = vsub.f32 %v341, %v343
        %v345 = vmul.f32 %v344, %v344
        %v346 = vadd.f32 %v338, %v345
        %347 = vset.pattern.permute.xlu0 2
        %348 = vperm.xlu0 %347, %v328
        %v349 = vpop.permute.xlu0 %348
        %v351 = vperm.slane %v325, 2
        %v352 = vsub.f32 %v349, %v351
        %v353 = vmul.f32 %v352, %v352
        %v354 = vadd.f32 %v346, %v353
        %vm355 = vcmp.lt.f32.partialorder %v354, 0.09
        %v356 = vsel %vm355, 1, 0
        %v357 = vcvt.s32.f32 %v356
        %359 = vrot.lane.b32.xlu0 %v357, 1
        %v360 = vpop.permute.xlu0 %359
        %vm362 = vcmask 7168
        %v363 = vsel %vm362, 0.0, %v360
        %v364 = vadd.f32 %v357, %v363
        %366 = vrot.lane.b32.xlu0 %v364, 2
        %v367 = vpop.permute.xlu0 %366
        %vm369 = vcmask 15360
        %v370 = vsel %vm369, 0.0, %v367
        %v371 = vadd.f32 %v364, %v370
        %373 = vrot.lane.b32.xlu0 %v371, 4
        %v374 = vpop.permute.xlu0 %373
        %vm376 = vcmask 31744
        %v377 = vsel %vm376, 0.0, %v374
        %v378 = vadd.f32 %v371, %v377
        %380 = vrot.lane.b32.xlu0 %v378, 8
        %v381 = vpop.permute.xlu0 %380
        %vm383 = vcmask 64512
        %v384 = vsel %vm383, 0.0, %v381
        %v385 = vadd.f32 %v378, %v384
        %v386 = vsub.f32 %v385, %v357
        %v387 = vlaneseq
        %v388 = vand.u32 %v387, 127
        %vm389 = vcmp.eq.s32.totalorder %v388, 0
        %v390 = vsel %vm389, 1, 0
        %v391 = vcvt.s32.f32 %v390
        %vm392 = vcmp.le.f32.partialorder %v385, 0.0
        %v393 = vsel %vm392, 1, 0
        %v394 = vcvt.s32.f32 %v393
        %396 = vset.pattern.permute.xlu0 15
        %397 = vperm.xlu0 %396, %v394
        %v398 = vpop.permute.xlu0 %397
        %v400 = vmul.f32 %v398, %v391
        %vm401 = vcmp.gt.f32.partialorder %v385, 1.0
        %v402 = vsel %vm401, 1.0, 0.0
        %vm403 = vcmp.gt.f32.partialorder %v385, 2.0
        %v404 = vsel %vm403, 2.0, 0.0
        %vm405 = vcmp.gt.f32.partialorder %v385, 3.0
        %v406 = vsel %vm405, 3.0, 0.0
        %408 = vrot.lane.b32.xlu0 %v402, 113
        %v409 = vpop.permute.xlu0 %408
        %411 = vrot.lane.b32.xlu0 %v404, 113
        %v412 = vpop.permute.xlu0 %411
        %414 = vrot.lane.b32.xlu0 %v406, 113
        %v415 = vpop.permute.xlu0 %414
        %417 = vset.pattern.permute.xlu0 0
        %418 = vperm.xlu0 %417, 0.0
        %v419 = vpop.permute.xlu0 %418
        %421 = vset.pattern.permute.xlu0 0
        %422 = vperm.xlu0 %421, %v409
        %v423 = vpop.permute.xlu0 %422
        %425 = vset.pattern.permute.xlu0 0
        %426 = vperm.xlu0 %425, %v412
        %v427 = vpop.permute.xlu0 %426
        %429 = vset.pattern.permute.xlu0 0
        %430 = vperm.xlu0 %429, %v415
        %v431 = vpop.permute.xlu0 %430
        %vm433 = vcmp.eq.f32.partialorder %v386, %v419
        %vm434 = vcmp.eq.f32.partialorder %v386, %v423
        %vm435 = vcmp.eq.f32.partialorder %v386, %v427
        %vm436 = vcmp.eq.f32.partialorder %v386, %v431
        %v437 = vsel %vm433, %v357, 0.0
        %v438 = vsel %vm434, %v357, 0.0
        %v439 = vsel %vm435, %v357, 0.0
        %v440 = vsel %vm436, %v357, 0.0
        %v441 = vadd.f32 %v437, %v400
        %v442 = vadd.f32 %v438, %v400
        %v443 = vadd.f32 %v439, %v400
        %v444 = vadd.f32 %v440, %v400
        %v445 = vpack.c.bf16 %v442, %v441
        %v446 = vpack.c.bf16 %v444, %v443
        %vm447 = vcmask 130048
        %v449 = vsel %vm447, %v327, 0
        %v452 = vsel %vm447, %v445, 0
        %v455 = vsel %vm447, %v446, 0
        %457 = vmatpush.bf16.xpose.msra.mxu0 0
        %458 = vmatpush.bf16.xpose.msra.mxu0 0
        %459 = vmatpush.bf16.xpose.msra.mxu0 0
        %460 = vmatpush.bf16.xpose.msra.mxu0 0
        %461 = vmatpush.bf16.xpose.msra.mxu0 0
        %462 = vmatpush.bf16.xpose.msra.mxu0 0
        %463 = vmatpush.bf16.xpose.msra.mxu0 %v455
        %464 = vmatpush.bf16.xpose.msra.mxu0 %v452
        %465 = vmatmul.bf16.gmra.mxu0 %v449
        %v466 = vpop.f32.mrf.mxu0
        %v467 = vadd.f32 0.0, %v466
        %v468 = vpop.f32.mrf.mxu0
        %469 = vdwg.mxu0
        %v471 = vsel %vm447, %v326, 0
        %473 = vmatpush.bf16.xpose.msra.mxu0 0
        %474 = vmatpush.bf16.xpose.msra.mxu0 0
        %475 = vmatpush.bf16.xpose.msra.mxu0 0
        %476 = vmatpush.bf16.xpose.msra.mxu0 0
        %477 = vmatpush.bf16.xpose.msra.mxu0 0
        %478 = vmatpush.bf16.xpose.msra.mxu0 0
        %479 = vmatpush.bf16.xpose.msra.mxu0 %v455
        %480 = vmatpush.bf16.xpose.msra.mxu0 %v452
        %481 = vmatmul.bf16.gmra.mxu0 %v471
        %v482 = vpop.f32.mrf.mxu0
        %v483 = vadd.f32 %v467, %v482
        %v484 = vpop.f32.mrf.mxu0
        %485 = vdwg.mxu0
        %v486 = vsub.f32 %v483, %v329
        %v488 = vrot.slane %v486, 1
        %v489 = vrot.slane %v486, 2
        %vm492 = vcmask 57344
        %493 = vst.msk [vmem:[%s297] sm:$0x1] %vm492, %v486
        %494 = vst.msk [vmem:[%s297 + $0x4] sm:$0x1] %vm492, %v488
        %495 = vst.msk [vmem:[%s297 + $0x8] sm:$0x1] %vm492, %v489
        %497 = vst [vmem:[#allocation1] sm:$0xff] %v483
        %s498 = scalar_lea.vmem [#allocation1], 3
        %v499 = vld [vmem:[%s498] ss:$9 sm:$0xff]
        %s500 = scalar_lea.vmem [#allocation1], 4
        %v501 = vld [vmem:[%s500] ss:$9 sm:$0xff]
        %s502 = scalar_lea.vmem [#allocation1], 5
        %v503 = vld [vmem:[%s502] ss:$9 sm:$0xff]
        %s504 = scalar_lea.vmem [#allocation1], 6
        %v505 = vld [vmem:[%s504] ss:$9 sm:$0xff]
        %s510 = scalar_lea.vmem %s297, 12 [#allocation2]
        %511 = vst.msk [vmem:[%s510] sm:$0x1] %vm492, %v499
        %512 = vst.msk [vmem:[%s510 + $0x4] sm:$0x1] %vm492, %v501
        %513 = vst.msk [vmem:[%s510 + $0x8] sm:$0x1] %vm492, %v503
        %514 = vst.msk [vmem:[%s510 + $0xc] sm:$0x1] %vm492, %v505
        %516 = vrot.lane.b32.xlu0 %v329, 8
        %v517 = vpop.permute.xlu0 %516
        %v519 = vsub.f32 %v483, %v517
        %v521 = vrot.slane %v519, 1
        %v522 = vrot.slane %v519, 2
        %v523 = vperm.slane %v519, 0
        %v524 = vperm.slane %v521, 0
        %v525 = vperm.slane %v522, 0
        %526 = vrot.lane.b32.xlu0 %v523, 120
        %v527 = vpop.permute.xlu0 %526
        %528 = vrot.lane.b32.xlu0 %v524, 120
        %v529 = vpop.permute.xlu0 %528
        %530 = vrot.lane.b32.xlu0 %v525, 120
        %v531 = vpop.permute.xlu0 %530
        %535 = vst.msk [vmem:[%s297 + $0x1] sm:$0x1] %vm492, %v527
        %536 = vst.msk [vmem:[%s297 + $0x5] sm:$0x1] %vm492, %v529
        %537 = vst.msk [vmem:[%s297 + $0x9] sm:$0x1] %vm492, %v531
        %538 = vst [vmem:[#allocation1] sm:$0xff] %v483
        %s539 = scalar_lea.vmem [#allocation1], 3
        %v540 = vld [vmem:[%s539] ss:$9 sm:$0xff]
        %s541 = scalar_lea.vmem [#allocation1], 4
        %v542 = vld [vmem:[%s541] ss:$9 sm:$0xff]
        %s543 = scalar_lea.vmem [#allocation1], 5
        %v544 = vld [vmem:[%s543] ss:$9 sm:$0xff]
        %s545 = scalar_lea.vmem [#allocation1], 6
        %v546 = vld [vmem:[%s545] ss:$9 sm:$0xff]
        %v547 = vperm.slane %v540, 0
        %v548 = vperm.slane %v542, 0
        %v549 = vperm.slane %v544, 0
        %v550 = vperm.slane %v546, 0
        %551 = vrot.lane.b32.xlu0 %v547, 120
        %v552 = vpop.permute.xlu0 %551
        %553 = vrot.lane.b32.xlu0 %v548, 120
        %v554 = vpop.permute.xlu0 %553
        %555 = vrot.lane.b32.xlu0 %v549, 120
        %v556 = vpop.permute.xlu0 %555
        %557 = vrot.lane.b32.xlu0 %v550, 120
        %v558 = vpop.permute.xlu0 %557
        %563 = vst.msk [vmem:[%s510 + $0x1] sm:$0x1] %vm492, %v552
        %564 = vst.msk [vmem:[%s510 + $0x5] sm:$0x1] %vm492, %v554
        %565 = vst.msk [vmem:[%s510 + $0x9] sm:$0x1] %vm492, %v556
        %566 = vst.msk [vmem:[%s510 + $0xd] sm:$0x1] %vm492, %v558
        %567 = vrot.lane.b32.xlu0 %v329, 16
        %v568 = vpop.permute.xlu0 %567
        %v570 = vsub.f32 %v483, %v568
        %v572 = vrot.slane %v570, 1
        %v573 = vrot.slane %v570, 2
        %v574 = vperm.slane %v570, 0
        %v575 = vperm.slane %v572, 0
        %v576 = vperm.slane %v573, 0
        %577 = vrot.lane.b32.xlu0 %v574, 112
        %v578 = vpop.permute.xlu0 %577
        %579 = vrot.lane.b32.xlu0 %v575, 112
        %v580 = vpop.permute.xlu0 %579
        %581 = vrot.lane.b32.xlu0 %v576, 112
        %v582 = vpop.permute.xlu0 %581
        %586 = vst.msk [vmem:[%s297 + $0x2] sm:$0x1] %vm492, %v578
        %587 = vst.msk [vmem:[%s297 + $0x6] sm:$0x1] %vm492, %v580
        %588 = vst.msk [vmem:[%s297 + $0xa] sm:$0x1] %vm492, %v582
        %589 = vst [vmem:[#allocation1] sm:$0xff] %v483
        %s590 = scalar_lea.vmem [#allocation1], 3
        %v591 = vld [vmem:[%s590] ss:$9 sm:$0xff]
        %s592 = scalar_lea.vmem [#allocation1], 4
        %v593 = vld [vmem:[%s592] ss:$9 sm:$0xff]
        %s594 = scalar_lea.vmem [#allocation1], 5
        %v595 = vld [vmem:[%s594] ss:$9 sm:$0xff]
        %s596 = scalar_lea.vmem [#allocation1], 6
        %v597 = vld [vmem:[%s596] ss:$9 sm:$0xff]
        %v598 = vperm.slane %v591, 0
        %v599 = vperm.slane %v593, 0
        %v600 = vperm.slane %v595, 0
        %v601 = vperm.slane %v597, 0
        %602 = vrot.lane.b32.xlu0 %v598, 112
        %v603 = vpop.permute.xlu0 %602
        %604 = vrot.lane.b32.xlu0 %v599, 112
        %v605 = vpop.permute.xlu0 %604
        %606 = vrot.lane.b32.xlu0 %v600, 112
        %v607 = vpop.permute.xlu0 %606
        %608 = vrot.lane.b32.xlu0 %v601, 112
        %v609 = vpop.permute.xlu0 %608
        %614 = vst.msk [vmem:[%s510 + $0x2] sm:$0x1] %vm492, %v603
        %615 = vst.msk [vmem:[%s510 + $0x6] sm:$0x1] %vm492, %v605
        %616 = vst.msk [vmem:[%s510 + $0xa] sm:$0x1] %vm492, %v607
        %617 = vst.msk [vmem:[%s510 + $0xe] sm:$0x1] %vm492, %v609
        %618 = vrot.lane.b32.xlu0 %v329, 24
        %v619 = vpop.permute.xlu0 %618
        %v621 = vsub.f32 %v483, %v619
        %v623 = vrot.slane %v621, 1
        %v624 = vrot.slane %v621, 2
        %v625 = vperm.slane %v621, 0
        %v626 = vperm.slane %v623, 0
        %v627 = vperm.slane %v624, 0
        %628 = vrot.lane.b32.xlu0 %v625, 104
        %v629 = vpop.permute.xlu0 %628
        %630 = vrot.lane.b32.xlu0 %v626, 104
        %v631 = vpop.permute.xlu0 %630
        %632 = vrot.lane.b32.xlu0 %v627, 104
        %v633 = vpop.permute.xlu0 %632
        %637 = vst.msk [vmem:[%s297 + $0x3] sm:$0x1] %vm492, %v629
        %638 = vst.msk [vmem:[%s297 + $0x7] sm:$0x1] %vm492, %v631
        %639 = vst.msk [vmem:[%s297 + $0xb] sm:$0x1] %vm492, %v633
        %640 = vst [vmem:[#allocation1] sm:$0xff] %v483
        %s641 = scalar_lea.vmem [#allocation1], 3
        %v642 = vld [vmem:[%s641] ss:$9 sm:$0xff]
        %s643 = scalar_lea.vmem [#allocation1], 4
        %v644 = vld [vmem:[%s643] ss:$9 sm:$0xff]
        %s645 = scalar_lea.vmem [#allocation1], 5
        %v646 = vld [vmem:[%s645] ss:$9 sm:$0xff]
        %s647 = scalar_lea.vmem [#allocation1], 6
        %v648 = vld [vmem:[%s647] ss:$9 sm:$0xff]
        %v649 = vperm.slane %v642, 0
        %v650 = vperm.slane %v644, 0
        %v651 = vperm.slane %v646, 0
        %v652 = vperm.slane %v648, 0
        %653 = vrot.lane.b32.xlu0 %v649, 104
        %v654 = vpop.permute.xlu0 %653
        %655 = vrot.lane.b32.xlu0 %v650, 104
        %v656 = vpop.permute.xlu0 %655
        %657 = vrot.lane.b32.xlu0 %v651, 104
        %v658 = vpop.permute.xlu0 %657
        %659 = vrot.lane.b32.xlu0 %v652, 104
        %v660 = vpop.permute.xlu0 %659
        %665 = vst.msk [vmem:[%s510 + $0x3] sm:$0x1] %vm492, %v654
        %666 = vst.msk [vmem:[%s510 + $0x7] sm:$0x1] %vm492, %v656
        %667 = vst.msk [vmem:[%s510 + $0xb] sm:$0x1] %vm492, %v658
        %668 = vst.msk [vmem:[%s510 + $0xf] sm:$0x1] %vm492, %v660
        %s669 = sand.u32 %s175, 1
        %s670 = scalar_lea.sflag [#allocation3], %s669
        %s671 = sand.u32 %s175, 1
        %s672 = smul.addr %s671, 28
        %s673 = scalar_lea.vmem [#allocation2], %s672
        // Predicated region
        $region41: #{tpu_custom_call.1} parent=39 // pred_check
          %p674 = pneg %p185
        $region42: #{tpu_custom_call.1} parent=39 // pred_check_branch
          %676 = sbr.rel (%p674) target = $region44
        $region43: #{tpu_custom_call.1} parent=39 // pred_region
          %678 = vsyncadd %s670, 0
          %s679 = smul.addr %s23, 7
          %s680 = sadd.s32 %s24, %s679
          %s681 = smul.addr %s680, 4
          %s682 = scalar_lea.hbm %s5, %s681
          %s683 = sshll.u32 %s673, 4
          %s684 = int_to_ptr.vmem [resolvable:$true] %s683
          %s685 = sshll.u32 %s682, 4
          %s686 = int_to_ptr.hbm [resolvable:$true] %s685
          %691 = dma.vmem_to_hbm [thread:$0]  %s684, 448, %s686, %s670, 64, 64, 4
        $region44: #{tpu_custom_call.1} parent=39 // pred_fallthru
          _
      $region40: #{tpu_custom_call.1} parent=5 // pred_fallthru
        _
      %p692 = scmp.le.s32.totalorder 2, %s14
      // Predicated region
      $region45: #{tpu_custom_call.1} parent=5 // pred_check
        %p693 = pneg %p692
      $region46: #{tpu_custom_call.1} parent=5 // pred_check_branch
        %695 = sbr.rel (%p693) target = $region48
      $region47: #{tpu_custom_call.1} parent=5 // pred_region
        %s696 = ssub.s32 %s14, 2
        // Predicated region
        $region49: #{tpu_custom_call.1} parent=47 // pred_check
          %p697 = pneg %p191
        $region50: #{tpu_custom_call.1} parent=47 // pred_check_branch
          %699 = sbr.rel (%p697) target = $region52
        $region51: #{tpu_custom_call.1} parent=47 // pred_region
          %s700 = sand.u32 %s176, 1
          %s701 = scalar_lea.sflag [#allocation3], %s700
          %s702 = sand.u32 %s176, 1
          %s703 = smul.addr %s702, 28
          %s704 = scalar_lea.vmem [#allocation2], %s703
          %706 = dma.done %s701, 448
        $region52: #{tpu_custom_call.1} parent=47 // pred_fallthru
          _
      $region48: #{tpu_custom_call.1} parent=5 // pred_fallthru
        _
    $region6: #{tpu_custom_call.1} parent=1 // loop_footer
      %s18 = sadd.s32 1, %s14
    $region7: #{tpu_custom_call.1} parent=1 // loop_footer_branch
      %13 = sbr.rel target = $region3
    $region8: #{tpu_custom_call.1} parent=1 // loop_exit
      _
    %707 = vsyncpa [#allocation3], 1
    %s708 = scalar_lea.sflag [#allocation3], 1
    %709 = vsyncpa %s708, 1

</llo_original>
